<compile_context>
chip_gen: v7x
topology: tpu7x:2x2x1
jax: 0.10.0
libtpu: 0.0.40
codegen_flags: <defaults>
</compile_context>

<pallas_src>
import functools

import jax
import jax.numpy as jnp
from jax import lax
from jax.experimental import pallas as pl
from jax.experimental.pallas import tpu as pltpu


# ---------------------------------------------------------------- kernel ----

def da_block_kernel(x_ref, w_ref, b_ref, g_ref, o_ref,
                    q_scr, k_scr, v_scr, attnc_scr, *, c, qk_pad, tq):
    j = pl.program_id(1)

    # ---- per-batch setup: fused qkv + CAM channel attention (query tile 0) --
    @pl.when(j == 0)
    def _():
        x = x_ref[...]                                              # (C, N) f32
        xb = x.astype(jnp.bfloat16)
        # Fused 1x1x1 convs.  q/k weight rows (and their biases) are
        # zero-padded to a sublane multiple, so the padded rows are exactly 0
        # and contribute nothing to the energy.
        qkv = (jnp.dot(w_ref[...], xb,
                       preferred_element_type=jnp.float32)
               + b_ref[...])                                        # (rows, N)
        q_scr[...] = qkv[:qk_pad].astype(jnp.bfloat16)
        k_scr[...] = qkv[qk_pad:2 * qk_pad].astype(jnp.bfloat16)
        v_scr[...] = qkv[2 * qk_pad:2 * qk_pad + c].astype(jnp.bfloat16)

        # CAM attention (C, C): kept in f32 (large-magnitude Gram entries are
        # too sensitive for bf16; it is only a C x C x N matmul).
        ec = lax.dot_general(x, x, (((1,), (1,)), ((), ())),
                             preferred_element_type=jnp.float32)    # (C, C)
        # softmax(rowmax(ec) - ec) == exp(rowmin(ec) - ec) / rowsum(...)
        pc = jnp.exp(jnp.min(ec, axis=-1, keepdims=True) - ec)
        attnc_scr[...] = pc * pl.reciprocal(
            jnp.sum(pc, axis=-1, keepdims=True), approx=True)

    # ---- per-query-tile PAM + CAM application + residuals -------------------
    off = pl.multiple_of(j * tq, tq)
    x_t = x_ref[:, pl.ds(off, tq)]                                  # (C, TQ) f32
    q_t = q_scr[:, pl.ds(off, tq)]                                  # (QKP, TQ)

    # Keys-major energy: e_t[n, m] = sum_i k[i, n] * q[i, m]  -> (N, TQ).
    e_t = lax.dot_general(k_scr[...], q_t, (((0,), (0,)), ((), ())),
                          preferred_element_type=jnp.float32)
    e_t = e_t - jnp.max(e_t, axis=0, keepdims=True)
    p_t = jnp.exp(e_t)                                              # f32 exp
    denom = jnp.sum(p_t, axis=0, keepdims=True)                     # (1, TQ)

    # Deferred normalization: un-normalized v @ p (standard MXU orientation),
    # then one (C, TQ)-sized scale by the per-query reciprocal.
    pam_un = jnp.dot(v_scr[...], p_t.astype(jnp.bfloat16),
                     preferred_element_type=jnp.float32)            # (C, TQ)
    pam = pam_un * pl.reciprocal(denom, approx=True)

    cam = jnp.dot(attnc_scr[...], x_t,
                  preferred_element_type=jnp.float32)               # (C, TQ)

    gp = g_ref[0]                                                   # SMEM scalar
    gc = g_ref[1]
    # DA_Block: (gamma_pam*pam + x) + (gamma_cam*cam + x)
    o_ref[...] = gp * pam + gc * cam + 2.0 * x_t


# --------------------------------------------------------------- wrapper ----

def da_block(x, params, *, tq=None):
    b, c, h, w, d = x.shape
    n = h * w * d
    c8 = c // 8
    qk_pad = max(8, ((c8 + 7) // 8) * 8)     # pad q/k rows to sublane multiple
    rows = 2 * qk_pad + c

    # Query tile: prefer 512/256/128 (multi-tile when possible), else full N.
    if tq is None:
        tq = n
        for cand in (512, 256, 128):
            if n % cand == 0 and n != cand:
                tq = cand
                break
    assert n % tq == 0
    nqt = n // tq

    def _pad_rows(m, r):
        return jnp.concatenate(
            [m, jnp.zeros((r - m.shape[0], m.shape[1]), m.dtype)], axis=0)

    def _pad_vec(v_, r):
        return jnp.concatenate(
            [v_, jnp.zeros((r - v_.shape[0],), v_.dtype)], axis=0)

    # NOTE: padded q/k rows are harmless only because BOTH the padded weight
    # rows AND the padded bias entries are zero.
    w_fused = jnp.concatenate([_pad_rows(params["wq"], qk_pad),
                               _pad_rows(params["wk"], qk_pad),
                               params["wv"]], axis=0)               # (rows, C)
    b_fused = jnp.concatenate([_pad_vec(params["bq"], qk_pad),
                               _pad_vec(params["bk"], qk_pad),
                               params["bv"]], axis=0).reshape(-1, 1)  # (rows, 1)
    w_bf = w_fused.astype(jnp.bfloat16)                     # bf16 MXU operand
    gammas = jnp.stack([params["gamma_pam"],
                        params["gamma_cam"]]).astype(jnp.float32)    # (2,)

    x2 = x.reshape(b, c, n)                                  # free reshape

    # Scoped-VMEM budget (raised explicitly; capped at v7x physical VMEM).
    est = (2 * c * n * 4            # x block (double buffered)
           + 2 * rows * c * 2       # fused weights (bf16)
           + 2 * rows * 4           # fused bias
           + 2 * c * tq * 4         # output tiles (double buffered)
           + 2 * qk_pad * n * 2     # q, k scratch (bf16)
           + c * n * 2              # v scratch (bf16)
           + c * c * 4              # CAM attention scratch
           + rows * n * 4           # qkv temporary (setup step)
           + 3 * tq * n * 4)        # energy / prob temporaries per tile
    vmem_limit = int(min(max(2 * est, 32 * 1024 * 1024), 64 * 1024 * 1024))

    out = pl.pallas_call(
        functools.partial(da_block_kernel, c=c, qk_pad=qk_pad, tq=tq),
        out_shape=jax.ShapeDtypeStruct((b, c, n), jnp.float32),
        grid=(b, nqt),
        in_specs=[
            pl.BlockSpec((None, c, n), lambda i, j: (i, 0, 0)),      # x (resident)
            pl.BlockSpec((rows, c), lambda i, j: (0, 0)),            # fused W
            pl.BlockSpec((rows, 1), lambda i, j: (0, 0)),            # fused b
            pl.BlockSpec(memory_space=pltpu.MemorySpace.SMEM),       # gammas
        ],
        out_specs=pl.BlockSpec((None, c, tq), lambda i, j: (i, 0, j)),
        scratch_shapes=[
            pltpu.VMEM((qk_pad, n), jnp.bfloat16),   # q (full N, cached)
            pltpu.VMEM((qk_pad, n), jnp.bfloat16),   # k (full N, cached)
            pltpu.VMEM((c, n), jnp.bfloat16),        # v (full N, cached)
            pltpu.VMEM((c, c), jnp.float32),         # CAM attention
        ],
        compiler_params=pltpu.CompilerParams(
            dimension_semantics=("parallel", "arbitrary"),
            vmem_limit_bytes=vmem_limit),
    )(x2, w_bf, b_fused, gammas)
    return out.reshape(b, c, h, w, d)


# --------------------------------------------------- pure-JAX reference -----

def da_block_ref(x, params):
    b, c, h, w, d = x.shape
    n = h * w * d
    xf = x.reshape(b, c, n)
    q = jnp.einsum("oc,bcn->bon", params["wq"], xf) + params["bq"][None, :, None]
    k = jnp.einsum("oc,bcn->bon", params["wk"], xf) + params["bk"][None, :, None]
    v = jnp.einsum("oc,bcn->bon", params["wv"], xf) + params["bv"][None, :, None]
    # PAM
    energy = jnp.einsum("bcm,bcn->bmn", q, k)
    attn = jax.nn.softmax(energy, axis=-1)
    pam = jnp.einsum("bcm,bnm->bcn", v, attn)
    pam_out = params["gamma_pam"] * pam + xf
    # CAM
    ec = jnp.einsum("bcm,bdm->bcd", xf, xf)
    ec = jnp.max(ec, axis=-1, keepdims=True) - ec
    attn_c = jax.nn.softmax(ec, axis=-1)
    cam = jnp.einsum("bcd,bdn->bcn", attn_c, xf)
    cam_out = params["gamma_cam"] * cam + xf
    return (pam_out + cam_out).reshape(b, c, h, w, d)


# ------------------------------------------------------------------ main ----

if __name__ == "__main__":
    key = jax.random.PRNGKey(0)
    kx, k1, k2, k3, k4, k5, k6 = jax.random.split(key, 7)

    # C must be divisible by 8 (PAM uses C//8 query/key channels).
    B, C, H, W, D = 2, 32, 8, 8, 4          # N = 256 -> 2 query tiles of 128
    C8 = C // 8

    x = jax.random.normal(kx, (B, C, H, W, D), jnp.float32)
    params = {
        "wq": 0.1 * jax.random.normal(k1, (C8, C), jnp.float32),
        "bq": 0.1 * jax.random.normal(k2, (C8,), jnp.float32),
        "wk": 0.1 * jax.random.normal(k3, (C8, C), jnp.float32),
        "bk": 0.1 * jax.random.normal(k4, (C8,), jnp.float32),
        "wv": 0.1 * jax.random.normal(k5, (C, C), jnp.float32),
        "bv": 0.1 * jax.random.normal(k6, (C,), jnp.float32),
        # nn.Parameter(torch.zeros(1)) in the module; nonzero here so the
        # attention paths are actually exercised by the test.
        "gamma_pam": jnp.array(0.3, jnp.float32),
        "gamma_cam": jnp.array(0.7, jnp.float32),
    }

    fwd = jax.jit(lambda xx: da_block(xx, params))
    out = fwd(x)
    jax.block_until_ready(out)

    ref = da_block_ref(x, params)
    assert out.shape == (B, C, H, W, D)
    assert bool(jnp.all(jnp.isfinite(out)))
    assert bool(jnp.allclose(out, ref, rtol=2e-2, atol=2e-2)), float(
        jnp.max(jnp.abs(out - ref)))
    print("KERNEL_OK")
</pallas_src>

<mosaic_0001>
module attributes {stable_mosaic.version = 11 : i64} {
  func.func @da_block_kernel(%arg0: i32, %arg1: i32, %arg2: memref<1x32x256xf32, #tpu.memory_space<vmem>>, %arg3: memref<48x32xbf16, #tpu.memory_space<vmem>>, %arg4: memref<48x1xf32, #tpu.memory_space<vmem>>, %arg5: memref<2xf32, #tpu.memory_space<smem>>, %arg6: memref<1x32x128xf32, #tpu.memory_space<vmem>>, %arg7: memref<8x256xbf16, #tpu.memory_space<vmem>>, %arg8: memref<8x256xbf16, #tpu.memory_space<vmem>>, %arg9: memref<32x256xbf16, #tpu.memory_space<vmem>>, %arg10: memref<32x32xf32, #tpu.memory_space<vmem>>) attributes {dimension_semantics = [#tpu.dimension_semantics<parallel>, #tpu.dimension_semantics<arbitrary>], iteration_bounds = array<i64: 2, 2>, scalar_prefetch = 0 : i64, scratch_operands = 4 : i64, tpu.core_type = #tpu.core_type<tc>, window_params = [{transform_indices = @transform_0, window_bounds = array<i64: 1, 32, 256>}, {pipeline_mode = #tpu.pipeline_mode<synchronous>, transform_indices = @transform_1, window_bounds = array<i64: 48, 32>}, {pipeline_mode = #tpu.pipeline_mode<synchronous>, transform_indices = @transform_2, window_bounds = array<i64: 48, 1>}, {transform_indices = @transform_3, window_bounds = array<i64: 2>}, {transform_indices = @transform_4, window_bounds = array<i64: 1, 32, 128>}]} {
    %c0_i32 = arith.constant 0 : i32
    %0 = arith.cmpi eq, %arg1, %c0_i32 : i32
    %1 = arith.extui %0 : i1 to i32
    %c0_i32_0 = arith.constant 0 : i32
    %2 = arith.cmpi ne, %1, %c0_i32_0 : i32
    scf.if %2 {
      %c0_18 = arith.constant 0 : index
      %c0_19 = arith.constant 0 : index
      %c0_20 = arith.constant 0 : index
      %40 = vector.load %arg2[%c0_18, %c0_19, %c0_20] : memref<1x32x256xf32, #tpu.memory_space<vmem>>, vector<1x32x256xf32>
      %41 = vector.shape_cast %40 : vector<1x32x256xf32> to vector<32x256xf32>
      %42 = arith.truncf %41 : vector<32x256xf32> to vector<32x256xbf16>
      %c0_21 = arith.constant 0 : index
      %c0_22 = arith.constant 0 : index
      %43 = vector.load %arg3[%c0_21, %c0_22] : memref<48x32xbf16, #tpu.memory_space<vmem>>, vector<48x32xbf16>
      %cst_23 = arith.constant dense<0.000000e+00> : vector<48x256xf32>
      %44 = tpu.matmul %43, %42, %cst_23 {dimension_numbers = #tpu.dot_dimension_numbers<[1], [0], [0], [1], [0, 0, 1, 1], [], []>} : vector<48x32xbf16>, vector<32x256xbf16>, vector<48x256xf32> -> vector<48x256xf32>
      %c0_24 = arith.constant 0 : index
      %c0_25 = arith.constant 0 : index
      %45 = vector.load %arg4[%c0_24, %c0_25] : memref<48x1xf32, #tpu.memory_space<vmem>>, vector<48x1xf32>
      %46 = vector.broadcast %45 : vector<48x1xf32> to vector<48x256xf32>
      %47 = arith.addf %44, %46 : vector<48x256xf32>
      %48 = vector.extract_strided_slice %47 {offsets = [0, 0], sizes = [8, 256], strides = [1, 1]} : vector<48x256xf32> to vector<8x256xf32>
      %49 = arith.truncf %48 : vector<8x256xf32> to vector<8x256xbf16>
      %c0_26 = arith.constant 0 : index
      %c0_27 = arith.constant 0 : index
      %50 = vector.load %arg7[%c0_26, %c0_27] : memref<8x256xbf16, #tpu.memory_space<vmem>>, vector<8x256xbf16>
      tpu.vector_store %arg7[%c0_26, %c0_27], %49 {strides = array<i32>} : memref<8x256xbf16, #tpu.memory_space<vmem>>, vector<8x256xbf16>,
      %51 = vector.extract_strided_slice %47 {offsets = [8, 0], sizes = [8, 256], strides = [1, 1]} : vector<48x256xf32> to vector<8x256xf32>
      %52 = arith.truncf %51 : vector<8x256xf32> to vector<8x256xbf16>
      %c0_28 = arith.constant 0 : index
      %c0_29 = arith.constant 0 : index
      %53 = vector.load %arg8[%c0_28, %c0_29] : memref<8x256xbf16, #tpu.memory_space<vmem>>, vector<8x256xbf16>
      tpu.vector_store %arg8[%c0_28, %c0_29], %52 {strides = array<i32>} : memref<8x256xbf16, #tpu.memory_space<vmem>>, vector<8x256xbf16>,
      %54 = vector.extract_strided_slice %47 {offsets = [16, 0], sizes = [32, 256], strides = [1, 1]} : vector<48x256xf32> to vector<32x256xf32>
      %55 = arith.truncf %54 : vector<32x256xf32> to vector<32x256xbf16>
      %c0_30 = arith.constant 0 : index
      %c0_31 = arith.constant 0 : index
      %56 = vector.load %arg9[%c0_30, %c0_31] : memref<32x256xbf16, #tpu.memory_space<vmem>>, vector<32x256xbf16>
      tpu.vector_store %arg9[%c0_30, %c0_31], %55 {strides = array<i32>} : memref<32x256xbf16, #tpu.memory_space<vmem>>, vector<32x256xbf16>,
      %cst_32 = arith.constant dense<0.000000e+00> : vector<32x32xf32>
      %57 = tpu.matmul %41, %41, %cst_32 {dimension_numbers = #tpu.dot_dimension_numbers<[1], [1], [0], [0], [0, 0, 1, 0], [], []>} : vector<32x256xf32>, vector<32x256xf32>, vector<32x32xf32> -> vector<32x32xf32>
      %cst_33 = arith.constant dense<0x7F800000> : vector<32xf32>
      %58 = vector.multi_reduction <minimumf>, %57, %cst_33 [1] : vector<32x32xf32> to vector<32xf32>
      %59 = vector.shape_cast %58 : vector<32xf32> to vector<32x1xf32>
      %60 = vector.broadcast %59 : vector<32x1xf32> to vector<32x32xf32>
      %61 = arith.subf %60, %57 : vector<32x32xf32>
      %62 = math.exp %61 : vector<32x32xf32>
      %cst_34 = arith.constant dense<0.000000e+00> : vector<32xf32>
      %63 = vector.multi_reduction <add>, %62, %cst_34 [1] : vector<32x32xf32> to vector<32xf32>
      %64 = vector.shape_cast %63 : vector<32xf32> to vector<32x1xf32>
      %65 = tpu.reciprocal %64 {approx = true} : vector<32x1xf32> -> vector<32x1xf32>
      %66 = vector.broadcast %65 : vector<32x1xf32> to vector<32x32xf32>
      %67 = arith.mulf %62, %66 : vector<32x32xf32>
      %c0_35 = arith.constant 0 : index
      %c0_36 = arith.constant 0 : index
      %68 = vector.load %arg10[%c0_35, %c0_36] : memref<32x32xf32, #tpu.memory_space<vmem>>, vector<32x32xf32>
      tpu.vector_store %arg10[%c0_35, %c0_36], %67 {strides = array<i32>} : memref<32x32xf32, #tpu.memory_space<vmem>>, vector<32x32xf32>,
    } else {
    }
    %c128_i32 = arith.constant 128 : i32
    %3 = arith.muli %arg1, %c128_i32 : i32
    %4 = tpu.assume_multiple %3, 128 : i32
    %c0 = arith.constant 0 : index
    %c0_1 = arith.constant 0 : index
    %5 = arith.index_cast %4 : i32 to index
    %6 = vector.load %arg2[%c0, %c0_1, %5] : memref<1x32x256xf32, #tpu.memory_space<vmem>>, vector<1x32x128xf32>
    %7 = vector.shape_cast %6 : vector<1x32x128xf32> to vector<32x128xf32>
    %c0_2 = arith.constant 0 : index
    %8 = arith.index_cast %4 : i32 to index
    %9 = vector.load %arg7[%c0_2, %8] : memref<8x256xbf16, #tpu.memory_space<vmem>>, vector<8x128xbf16>
    %c0_3 = arith.constant 0 : index
    %c0_4 = arith.constant 0 : index
    %10 = vector.load %arg8[%c0_3, %c0_4] : memref<8x256xbf16, #tpu.memory_space<vmem>>, vector<8x256xbf16>
    %cst = arith.constant dense<0.000000e+00> : vector<256x128xf32>
    %11 = tpu.matmul %10, %9, %cst {dimension_numbers = #tpu.dot_dimension_numbers<[0], [0], [1], [1], [0, 1, 1, 1], [], []>} : vector<8x256xbf16>, vector<8x128xbf16>, vector<256x128xf32> -> vector<256x128xf32>
    %cst_5 = arith.constant dense<0xFF800000> : vector<128xf32>
    %12 = vector.multi_reduction <maximumf>, %11, %cst_5 [0] : vector<256x128xf32> to vector<128xf32>
    %13 = vector.shape_cast %12 : vector<128xf32> to vector<1x128xf32>
    %14 = vector.broadcast %13 : vector<1x128xf32> to vector<256x128xf32>
    %15 = arith.subf %11, %14 : vector<256x128xf32>
    %16 = math.exp %15 : vector<256x128xf32>
    %cst_6 = arith.constant dense<0.000000e+00> : vector<128xf32>
    %17 = vector.multi_reduction <add>, %16, %cst_6 [0] : vector<256x128xf32> to vector<128xf32>
    %18 = vector.shape_cast %17 : vector<128xf32> to vector<1x128xf32>
    %c0_7 = arith.constant 0 : index
    %c0_8 = arith.constant 0 : index
    %19 = vector.load %arg9[%c0_7, %c0_8] : memref<32x256xbf16, #tpu.memory_space<vmem>>, vector<32x256xbf16>
    %20 = arith.truncf %16 : vector<256x128xf32> to vector<256x128xbf16>
    %cst_9 = arith.constant dense<0.000000e+00> : vector<32x128xf32>
    %21 = tpu.matmul %19, %20, %cst_9 {dimension_numbers = #tpu.dot_dimension_numbers<[1], [0], [0], [1], [0, 0, 1, 1], [], []>} : vector<32x256xbf16>, vector<256x128xbf16>, vector<32x128xf32> -> vector<32x128xf32>
    %22 = tpu.reciprocal %18 {approx = true} : vector<1x128xf32> -> vector<1x128xf32>
    %23 = vector.broadcast %22 : vector<1x128xf32> to vector<32x128xf32>
    %24 = arith.mulf %21, %23 : vector<32x128xf32>
    %c0_10 = arith.constant 0 : index
    %c0_11 = arith.constant 0 : index
    %25 = vector.load %arg10[%c0_10, %c0_11] : memref<32x32xf32, #tpu.memory_space<vmem>>, vector<32x32xf32>
    %cst_12 = arith.constant dense<0.000000e+00> : vector<32x128xf32>
    %26 = tpu.matmul %25, %7, %cst_12 {dimension_numbers = #tpu.dot_dimension_numbers<[1], [0], [0], [1], [0, 0, 1, 1], [], []>} : vector<32x32xf32>, vector<32x128xf32>, vector<32x128xf32> -> vector<32x128xf32>
    %c0_13 = arith.constant 0 : index
    %27 = memref.load %arg5[%c0_13] : memref<2xf32, #tpu.memory_space<smem>>
    %c1 = arith.constant 1 : index
    %28 = memref.load %arg5[%c1] : memref<2xf32, #tpu.memory_space<smem>>
    %29 = vector.broadcast %27 : f32 to vector<32x128xf32>
    %30 = arith.mulf %29, %24 : vector<32x128xf32>
    %31 = vector.broadcast %28 : f32 to vector<32x128xf32>
    %32 = arith.mulf %31, %26 : vector<32x128xf32>
    %33 = arith.addf %30, %32 : vector<32x128xf32>
    %cst_14 = arith.constant 2.000000e+00 : f32
    %34 = vector.broadcast %cst_14 : f32 to vector<32x128xf32>
    %35 = arith.mulf %34, %7 : vector<32x128xf32>
    %36 = arith.addf %33, %35 : vector<32x128xf32>
    %c0_15 = arith.constant 0 : index
    %c0_16 = arith.constant 0 : index
    %c0_17 = arith.constant 0 : index
    %37 = vector.load %arg6[%c0_15, %c0_16, %c0_17] : memref<1x32x128xf32, #tpu.memory_space<vmem>>, vector<1x32x128xf32>
    %38 = vector.shape_cast %37 : vector<1x32x128xf32> to vector<32x128xf32>
    %39 = vector.shape_cast %36 : vector<32x128xf32> to vector<1x32x128xf32>
    tpu.vector_store %arg6[%c0_15, %c0_16, %c0_17], %39 {strides = array<i32>} : memref<1x32x128xf32, #tpu.memory_space<vmem>>, vector<1x32x128xf32>,
    return
  }
  func.func @transform_0(%arg0: i32, %arg1: i32) -> (i32, i32, i32) {
    %c0_i32 = arith.constant 0 : i32
    %c0_i32_0 = arith.constant 0 : i32
    %c0_i32_1 = arith.constant 0 : i32
    return %arg0, %c0_i32, %c0_i32_0 : i32, i32, i32
  }
  func.func @transform_1(%arg0: i32, %arg1: i32) -> (i32, i32) {
    %c0_i32 = arith.constant 0 : i32
    %c0_i32_0 = arith.constant 0 : i32
    %c0_i32_1 = arith.constant 0 : i32
    return %c0_i32, %c0_i32_0 : i32, i32
  }
  func.func @transform_2(%arg0: i32, %arg1: i32) -> (i32, i32) {
    %c0_i32 = arith.constant 0 : i32
    %c0_i32_0 = arith.constant 0 : i32
    %c0_i32_1 = arith.constant 0 : i32
    return %c0_i32, %c0_i32_0 : i32, i32
  }
  func.func @transform_3(%arg0: i32, %arg1: i32) -> i32 {
    %c0_i32 = arith.constant 0 : i32
    %c0_i32_0 = arith.constant 0 : i32
    return %c0_i32 : i32
  }
  func.func @transform_4(%arg0: i32, %arg1: i32) -> (i32, i32, i32) {
    %c0_i32 = arith.constant 0 : i32
    %c0_i32_0 = arith.constant 0 : i32
    return %arg0, %c0_i32, %arg1 : i32, i32, i32
  }
}

</mosaic_0001>

<llo_original>
// kernel: _lambda_.1
$region0: #{_lambda_.1}
  #allocation0 [shape = 'u32[]', space=smem, size = 0x4, offset = 0x4, fixed_abs, tag = 'smem constant byte address 0x4 - core index']
  #allocation1 [shape = 'u32[144,128]{1,0:T(1,128)}', space=vmem, size = 0x12000, scoped, tag = 'internal scratch']
  #allocation2 [shape = 'bf16[8,256]{1,0:T(8,128)(2,1)}', space=vmem, size = 0x1000, scoped, tag = 'scratch operand']
  #allocation3 [shape = 'bf16[8,256]{1,0:T(8,128)(2,1)}', space=vmem, size = 0x1000, scoped, tag = 'scratch operand']
  #allocation4 [shape = 'bf16[32,256]{1,0:T(16,128)(2,1)}', space=vmem, size = 0x4000, scoped, tag = 'scratch operand']
  #allocation5 [shape = 'f32[32,32]{1,0:T(8,128)}', space=vmem, size = 0x4000, scoped, tag = 'scratch operand']
  %s0 = inlined_call_operand.vmem [shape: f32[2,32,256], index: 0, kind: input, shape index: {}]
  %s1 = inlined_call_operand.vmem [shape: bf16[48,32], index: 1, kind: input, shape index: {}]
  %s2 = inlined_call_operand.vmem [shape: f32[48,1], index: 2, kind: input, shape index: {}]
  %s3 = inlined_call_operand.vmem [shape: f32[2], index: 3, kind: input, shape index: {}]
  %s4 = inlined_call_operand.vmem [shape: f32[2,32,256], index: 4, kind: output, shape index: {}]
  %s5 = sld [smem:[#allocation0]]
  $region91: #{_lambda_.1} parent=0
    _
  %s7 = ssub.s32 1, %s5
  %s8 = scalar_select 0, %s7, %s5
  $region1: #{_lambda_.1} parent=0
    #allocation6 [shape = 'u8[512]{0}', space=smem, size = 0x200, scoped, tag = 'input window, operand 3, single buffered']
    #allocation7 [shape = 's32[2]{0}', space=sflag, size = 0x8, scoped, tag = 'scoped memory for _lambda_.1']
    #allocation8 [shape = 'u8[32768]{0}', space=vmem, size = 0x8000, scoped, tag = 'output window, operand 0']
    %9 = vsyncpa [#allocation7], 0
    loop: start=0, step=1, limit=6
    $region2: #{_lambda_.1} parent=1 // loop_pre_header
      _
    $region3: #{_lambda_.1} parent=1 // loop_header
      %s11 = sphi 0, %s15
      %p12 = scmp.ge.s32.totalorder %s11, 6
      %s18 = sphi 0, %s30
      %s19 = sphi 0, %s26
      %s20 = sphi 0, %s18
      %s21 = sphi 0, %s19
      %s22 = sphi 0, %s20
      %s23 = sphi 0, %s21
      %s33 = sphi 0, %s35
      %s36 = sphi 0, %s33
      %s37 = sphi 0, %s36
      %s53 = sphi 0, %s37
      %s57 = sphi 0, %s57
      %s59 = sphi 0, %s57
      %s60 = sphi 0, %s59
      %s74 = sphi 0, %s60
      %s78 = sphi 0, %s78
      %s80 = sphi 0, %s78
      %s81 = sphi 0, %s80
      %s95 = sphi 0, %s81
      %s99 = sphi 0, %s99
      %s101 = sphi 0, %s99
      %s102 = sphi 0, %s101
      %s116 = sphi 0, %s102
      %s124 = sphi 0, %s126
      %s127 = sphi 0, %s124
      %s128 = sphi 0, %s127
      %s144 = sphi 0, %s128
    $region4: #{_lambda_.1} parent=1 // loop_header_branch
      %14 = sbr.rel (%p12) target = $region8
    $region5: #{_lambda_.1} parent=1 // loop_body
      %s16 = ssub.s32 %s11, 1
      %s17 = ssub.s32 %s11, 2
      %s24 = sadd.s32 1, %s19
      %p25 = scmp.ge.s32.totalorder %s24, 2
      %s26 = scalar_select %p25, 0, %s24
      %s27 = sadd.s32 1, %s18
      %s28 = scalar_select %p25, %s27, %s18
      %p29 = scmp.ge.s32.totalorder %s28, 2
      %s30 = scalar_select %p29, 0, %s28
      %s31 = ssub.s32 %s18, %s30
      %p32 = scmp.eq.s32.totalorder %s31, 0
      %s34 = sadd.s32 %s33, 1
      %s35 = scalar_select %p32, %s33, %s34
      %p38 = pneg %p32
      %p39 = scmp.eq.s32.totalorder %s11, 3
      %p40 = por %p38, %p39
      %p41 = scmp.ne.s32.totalorder %s33, %s36
      %p42 = scmp.eq.s32.totalorder %s11, 0
      %p43 = por %p41, %p42
      %p44 = scmp.ne.s32.totalorder %s33, %s36
      %p45 = scmp.eq.s32.totalorder %s16, 3
      %p46 = por %p44, %p45
      %p47 = scmp.ne.s32.totalorder %s36, %s37
      %p48 = scmp.eq.s32.totalorder %s16, 0
      %p49 = por %p47, %p48
      %p50 = scmp.ne.s32.totalorder %s36, %s37
      %p51 = scmp.eq.s32.totalorder %s17, 3
      %p52 = por %p50, %p51
      %p54 = scmp.ne.s32.totalorder %s37, %s53
      %p55 = scmp.eq.s32.totalorder %s17, 0
      %p56 = por %p54, %p55
      %s58 = sadd.s32 %s57, 1
      %p61 = scmp.eq.s32.totalorder %s11, 3
      %p62 = scmp.ne.s32.totalorder %s57, %s59
      %p63 = scmp.eq.s32.totalorder %s11, 0
      %p64 = por %p62, %p63
      %p65 = scmp.ne.s32.totalorder %s57, %s59
      %p66 = scmp.eq.s32.totalorder %s16, 3
      %p67 = por %p65, %p66
      %p68 = scmp.ne.s32.totalorder %s59, %s60
      %p69 = scmp.eq.s32.totalorder %s16, 0
      %p70 = por %p68, %p69
      %p71 = scmp.ne.s32.totalorder %s59, %s60
      %p72 = scmp.eq.s32.totalorder %s17, 3
      %p73 = por %p71, %p72
      %p75 = scmp.ne.s32.totalorder %s60, %s74
      %p76 = scmp.eq.s32.totalorder %s17, 0
      %p77 = por %p75, %p76
      %s79 = sadd.s32 %s78, 1
      %p82 = scmp.eq.s32.totalorder %s11, 3
      %p83 = scmp.ne.s32.totalorder %s78, %s80
      %p84 = scmp.eq.s32.totalorder %s11, 0
      %p85 = por %p83, %p84
      %p86 = scmp.ne.s32.totalorder %s78, %s80
      %p87 = scmp.eq.s32.totalorder %s16, 3
      %p88 = por %p86, %p87
      %p89 = scmp.ne.s32.totalorder %s80, %s81
      %p90 = scmp.eq.s32.totalorder %s16, 0
      %p91 = por %p89, %p90
      %p92 = scmp.ne.s32.totalorder %s80, %s81
      %p93 = scmp.eq.s32.totalorder %s17, 3
      %p94 = por %p92, %p93
      %p96 = scmp.ne.s32.totalorder %s81, %s95
      %p97 = scmp.eq.s32.totalorder %s17, 0
      %p98 = por %p96, %p97
      %s100 = sadd.s32 %s99, 1
      %p103 = scmp.eq.s32.totalorder %s11, 3
      %p104 = scmp.ne.s32.totalorder %s99, %s101
      %p105 = scmp.eq.s32.totalorder %s11, 0
      %p106 = por %p104, %p105
      %p107 = scmp.ne.s32.totalorder %s99, %s101
      %p108 = scmp.eq.s32.totalorder %s16, 3
      %p109 = por %p107, %p108
      %p110 = scmp.ne.s32.totalorder %s101, %s102
      %p111 = scmp.eq.s32.totalorder %s16, 0
      %p112 = por %p110, %p111
      %p113 = scmp.ne.s32.totalorder %s101, %s102
      %p114 = scmp.eq.s32.totalorder %s17, 3
      %p115 = por %p113, %p114
      %p117 = scmp.ne.s32.totalorder %s102, %s116
      %p118 = scmp.eq.s32.totalorder %s17, 0
      %p119 = por %p117, %p118
      %s120 = ssub.s32 %s18, %s30
      %s121 = ssub.s32 %s19, %s26
      %s122 = sor.u32 %s120, %s121
      %p123 = scmp.eq.s32.totalorder %s122, 0
      %s125 = sadd.s32 %s124, 1
      %s126 = scalar_select %p123, %s124, %s125
      %p129 = pneg %p123
      %p130 = scmp.eq.s32.totalorder %s11, 3
      %p131 = por %p129, %p130
      %p132 = scmp.ne.s32.totalorder %s124, %s127
      %p133 = scmp.eq.s32.totalorder %s11, 0
      %p134 = por %p132, %p133
      %p135 = scmp.ne.s32.totalorder %s124, %s127
      %p136 = scmp.eq.s32.totalorder %s16, 3
      %p137 = por %p135, %p136
      %p138 = scmp.ne.s32.totalorder %s127, %s128
      %p139 = scmp.eq.s32.totalorder %s16, 0
      %p140 = por %p138, %p139
      %p141 = scmp.ne.s32.totalorder %s127, %s128
      %p142 = scmp.eq.s32.totalorder %s17, 3
      %p143 = por %p141, %p142
      %p145 = scmp.ne.s32.totalorder %s128, %s144
      %p146 = scmp.eq.s32.totalorder %s17, 0
      %p147 = por %p145, %p146
      %p148 = scmp.le.s32.totalorder 1, %s11
      %p149 = scmp.lt.s32.totalorder %s11, 5
      %p150 = pnand %p148, %p149
      %p151 = pneg %p150
      // Predicated region
      $region9: #{_lambda_.1} parent=5 // pred_check
        _
      $region10: #{_lambda_.1} parent=5 // pred_check_branch
        %153 = sbr.rel (%p150) target = $region12
      $region11: #{_lambda_.1} parent=5 // pred_region
        %s154 = ssub.s32 %s11, 1
        // Predicated region
        $region13: #{_lambda_.1} parent=11 // pred_check
          %p155 = pneg %p70
        $region14: #{_lambda_.1} parent=11 // pred_check_branch
          %157 = sbr.rel (%p155) target = $region16
        $region15: #{_lambda_.1} parent=11 // pred_region
          _
        $region16: #{_lambda_.1} parent=11 // pred_fallthru
          _
        // Predicated region
        $region17: #{_lambda_.1} parent=11 // pred_check
          %p158 = pneg %p91
        $region18: #{_lambda_.1} parent=11 // pred_check_branch
          %160 = sbr.rel (%p158) target = $region20
        $region19: #{_lambda_.1} parent=11 // pred_region
          _
        $region20: #{_lambda_.1} parent=11 // pred_fallthru
          _
        // Predicated region
        $region21: #{_lambda_.1} parent=11 // pred_check
          %p161 = pneg %p112
        $region22: #{_lambda_.1} parent=11 // pred_check_branch
          %163 = sbr.rel (%p161) target = $region24
        $region23: #{_lambda_.1} parent=11 // pred_region
          %s165 = ssub.s32 16, 16
          %166 = vsyncadd [#allocation7], %s165
          %s168 = sshll.u32 %s3, 4
          %s169 = int_to_ptr.vmem [resolvable:$true] %s168
          %171 = dma.vmem_to_smem %s169, 16, [#allocation6], [#allocation7]
        $region24: #{_lambda_.1} parent=11 // pred_fallthru
          _
      $region12: #{_lambda_.1} parent=5 // pred_fallthru
        _
      %p172 = scmp.lt.s32.totalorder %s11, 4
      // Predicated region
      $region25: #{_lambda_.1} parent=5 // pred_check
        %p173 = pneg %p172
      $region26: #{_lambda_.1} parent=5 // pred_check_branch
        %175 = sbr.rel (%p173) target = $region28
      $region27: #{_lambda_.1} parent=5 // pred_region
        // Predicated region
        $region29: #{_lambda_.1} parent=27 // pred_check
          %p176 = pneg %p43
        $region30: #{_lambda_.1} parent=27 // pred_check_branch
          %178 = sbr.rel (%p176) target = $region32
        $region31: #{_lambda_.1} parent=27 // pred_region
          %p179 = scmp.lt.s32.totalorder %s18, 1
          %s180 = scalar_select %p179, %s18, 1
          %s181 = smul.addr %s180, 8
          %s182 = smul.addr %s181, 8
          %s183 = scalar_lea.vmem %s0, %s182
        $region32: #{_lambda_.1} parent=27 // pred_fallthru
          _
      $region28: #{_lambda_.1} parent=5 // pred_fallthru
        _
      %p184 = scmp.le.s32.totalorder 1, %s11
      %p185 = scmp.lt.s32.totalorder %s11, 5
      %p186 = pnand %p184, %p185
      %p187 = pneg %p186
      // Predicated region
      $region33: #{_lambda_.1} parent=5 // pred_check
        _
      $region34: #{_lambda_.1} parent=5 // pred_check_branch
        %189 = sbr.rel (%p186) target = $region36
      $region35: #{_lambda_.1} parent=5 // pred_region
        %s190 = ssub.s32 %s11, 1
        // Predicated region
        $region37: #{_lambda_.1} parent=35 // pred_check
          %p191 = pneg %p112
        $region38: #{_lambda_.1} parent=35 // pred_check_branch
          %193 = sbr.rel (%p191) target = $region40
        $region39: #{_lambda_.1} parent=35 // pred_region
          %194 = dma.done [#allocation7], 16
        $region40: #{_lambda_.1} parent=35 // pred_fallthru
          _
        %195 = sfence
        %p196 = scmp.lt.s32.totalorder %s20, 1
        %s197 = scalar_select %p196, %s20, 1
        %s198 = smul.addr %s197, 8
        %s199 = smul.addr %s198, 8
        %s200 = scalar_lea.vmem %s0, %s199
        %p201 = pneg %p49
        %p202 = pneg %p46
        %p203 = pneg %p70
        %p204 = pneg %p67
        %p205 = pneg %p91
        %p206 = pneg %p88
        %p207 = pneg %p112
        %p208 = pneg %p109
        %p209 = pneg %p140
        %p210 = pneg %p137
        %s211 = sand.u32 %s127, 1
        %s212 = sand.u32 %s127, 1
        %s213 = smul.addr %s212, 32
        %s214 = scalar_lea.vmem [#allocation8], %s213
        %p215 = scmp.lt.s32.totalorder %s20, 1
        %s216 = scalar_select %p215, %s20, 1
        %s217 = smul.addr %s216, 8
        %s218 = smul.addr %s217, 8
        %s219 = scalar_lea.vmem %s0, %s218
        %p221 = scmp.eq.s32.totalorder %s21, 0
        // Predicated region
        $region41: #{_lambda_.1} parent=35 // pred_check
          %p222 = pneg %p221
        $region42: #{_lambda_.1} parent=35 // pred_check_branch
          %224 = sbr.rel (%p222) target = $region44
        $region43: #{_lambda_.1} parent=35 // pred_region
          %v225 = vld [vmem:[%s219] sm:$0xff]
          %v226 = vld [vmem:[%s219 + $0x8] sm:$0xff]
          %v227 = vld [vmem:[%s219 + $0x10] sm:$0xff]
          %v228 = vld [vmem:[%s219 + $0x18] sm:$0xff]
          %v229 = vld [vmem:[%s219 + $0x20] sm:$0xff]
          %v230 = vld [vmem:[%s219 + $0x28] sm:$0xff]
          %v231 = vld [vmem:[%s219 + $0x30] sm:$0xff]
          %v232 = vld [vmem:[%s219 + $0x38] sm:$0xff]
          %v233 = vpack.c.bf16 %v227, %v225
          %v234 = vpack.c.bf16 %v228, %v226
          %v235 = vpack.c.bf16 %v231, %v229
          %v236 = vpack.c.bf16 %v232, %v230
          %v237 = vld [vmem:[%s1] sm:$0xf]
          %v238 = vld [vmem:[%s1 + $0x4] sm:$0xf]
          %v239 = vld [vmem:[%s1 + $0x8] sm:$0xf]
          %v240 = vld [vmem:[%s1 + $0xc] sm:$0xf]
          %v241 = vld [vmem:[%s1 + $0x10] sm:$0xf]
          %v242 = vld [vmem:[%s1 + $0x14] sm:$0xf]
          %v243 = vld [vmem:[%s2] sm:$0xff]
          %v244 = vld [vmem:[%s2 + $0x8] sm:$0xff]
          %v245 = vld [vmem:[%s2 + $0x10] sm:$0xff]
          %v246 = vld [vmem:[%s2 + $0x18] sm:$0xff]
          %v247 = vld [vmem:[%s2 + $0x20] sm:$0xff]
          %v248 = vld [vmem:[%s2 + $0x28] sm:$0xff]
          %250 = vset.pattern.permute.xlu0 0
          %251 = vperm.xlu0 %250, %v243
          %v252 = vpop.permute.xlu0 %251
          %255 = vset.pattern.permute.xlu0 0
          %256 = vperm.xlu0 %255, %v244
          %v257 = vpop.permute.xlu0 %256
          %260 = vset.pattern.permute.xlu0 0
          %261 = vperm.xlu0 %260, %v245
          %v262 = vpop.permute.xlu0 %261
          %265 = vset.pattern.permute.xlu0 0
          %266 = vperm.xlu0 %265, %v246
          %v267 = vpop.permute.xlu0 %266
          %270 = vset.pattern.permute.xlu0 0
          %271 = vperm.xlu0 %270, %v247
          %v272 = vpop.permute.xlu0 %271
          %275 = vset.pattern.permute.xlu0 0
          %276 = vperm.xlu0 %275, %v248
          %v277 = vpop.permute.xlu0 %276
          %v285 = vunpack.c.l.b16 %v237
          %v286 = vunpack.c.l.b16 %v238
          %v287 = vunpack.c.l.b16 %v239
          %v288 = vunpack.c.l.b16 %v240
          %v289 = vunpack.c.l.b16 %v241
          %v290 = vunpack.c.l.b16 %v242
          %v291 = vpack.c.b16 %v286, %v285
          %v292 = vpack.c.b16 %v288, %v287
          %v293 = vpack.c.b16 %v290, %v289
          %vm294 = vcmask 261120
          %v296 = vsel %vm294, %v291, 0
          %v299 = vsel %vm294, %v292, 0
          %v302 = vsel %vm294, %v293, 0
          %304 = vmatprep.subr.bf16.mxu0 %v234
          %305 = vmatpush1.bf16.msra.mxu0 %v233
          %306 = vmatprep.subr.bf16.mxu0 %v236
          %307 = vmatpush1.bf16.msra.mxu0 %v235
          %308 = vmatprep.subr.bf16.mxu0 0
          %309 = vmatpush1.bf16.msra.mxu0 0
          %310 = vmatprep.subr.bf16.mxu0 0
          %311 = vmatpush1.bf16.msra.mxu0 0
          %312 = vmatprep.subr.bf16.mxu0 0
          %313 = vmatpush1.bf16.msra.mxu0 0
          %314 = vmatprep.subr.bf16.mxu0 0
          %315 = vmatpush1.bf16.msra.mxu0 0
          %316 = vmatprep.subr.bf16.mxu0 0
          %317 = vmatpush1.bf16.msra.mxu0 0
          %318 = vmatprep.subr.bf16.mxu0 0
          %319 = vmatpush1.bf16.msra.mxu0 0
          %320 = vmatprep.subr.bf16.mxu0 0
          %321 = vmatpush1.bf16.msra.mxu0 0
          %322 = vmatprep.subr.bf16.mxu0 0
          %323 = vmatpush1.bf16.msra.mxu0 0
          %324 = vmatprep.subr.bf16.mxu0 0
          %325 = vmatpush1.bf16.msra.mxu0 0
          %326 = vmatprep.subr.bf16.mxu0 0
          %327 = vmatpush1.bf16.msra.mxu0 0
          %328 = vmatprep.subr.bf16.mxu0 0
          %329 = vmatpush1.bf16.msra.mxu0 0
          %330 = vmatprep.subr.bf16.mxu0 0
          %331 = vmatpush1.bf16.msra.mxu0 0
          %332 = vmatprep.subr.bf16.mxu0 0
          %333 = vmatpush1.bf16.msra.mxu0 0
          %334 = vmatprep.subr.bf16.mxu0 0
          %335 = vmatpush1.bf16.msra.mxu0 0
          %336 = vmatprep.mubr.bf16.mxu0 0
          %337 = vmatmul.mubr.bf16.gmra.mrb[0].mxu0 %v296
          %v338 = vpop.f32.mrb[0].mxu0
          %v339 = vadd.f32 %v252, %v338
          %v340 = vpop.f32.mrb[0].mxu0
          %v341 = vadd.f32 %v252, %v340
          %v342 = vpop.f32.mrb[0].mxu0
          %v343 = vadd.f32 %v257, %v342
          %v344 = vpop.f32.mrb[0].mxu0
          %v345 = vadd.f32 %v257, %v344
          %346 = vmatprep.mubr.bf16.mxu0 0
          %347 = vmatmul.mubr.bf16.gmra.mrb[0].mxu0 %v299
          %v348 = vpop.f32.mrb[0].mxu0
          %v349 = vadd.f32 %v262, %v348
          %v350 = vpop.f32.mrb[0].mxu0
          %v351 = vadd.f32 %v262, %v350
          %v352 = vpop.f32.mrb[0].mxu0
          %v353 = vadd.f32 %v267, %v352
          %v354 = vpop.f32.mrb[0].mxu0
          %v355 = vadd.f32 %v267, %v354
          %356 = vmatprep.mubr.bf16.mxu0 0
          %357 = vmatmul.mubr.bf16.gmra.mrb[0].mxu0 %v302
          %v358 = vpop.f32.mrb[0].mxu0
          %v359 = vadd.f32 %v272, %v358
          %v360 = vpop.f32.mrb[0].mxu0
          %v361 = vadd.f32 %v272, %v360
          %v362 = vpop.f32.mrb[0].mxu0
          %v363 = vadd.f32 %v277, %v362
          %v364 = vpop.f32.mrb[0].mxu0
          %v365 = vadd.f32 %v277, %v364
          %366 = vdwg.mxu0
          %v367 = vpack.c.bf16 %v339, %v339
          %v368 = vpack.c.bf16 %v341, %v341
          %v371 = vunpack.c.l.b16 %v367
          %v372 = vunpack.c.l.b16 %v368
          %v373 = vpack.c.b16 %v372, %v371
          %375 = vst [vmem:[#allocation2] sm:$0xff] %v373
          %v376 = vpack.c.bf16 %v343, %v343
          %v377 = vpack.c.bf16 %v345, %v345
          %v380 = vunpack.c.l.b16 %v376
          %v381 = vunpack.c.l.b16 %v377
          %v382 = vpack.c.b16 %v381, %v380
          %384 = vst [vmem:[#allocation3] sm:$0xff] %v382
          %v385 = vpack.c.bf16 %v353, %v349
          %v386 = vpack.c.bf16 %v355, %v351
          %v387 = vpack.c.bf16 %v363, %v359
          %v388 = vpack.c.bf16 %v365, %v361
          %389 = vst [vmem:[#allocation4] sm:$0xff] %v385
          %390 = vst [vmem:[#allocation4 + $0x8] sm:$0xff] %v386
          %391 = vst [vmem:[#allocation4 + $0x10] sm:$0xff] %v387
          %392 = vst [vmem:[#allocation4 + $0x18] sm:$0xff] %v388
          %393 = vmatprep.subr.mxu0 %v226
          %394 = vmatpush1.xpose.msra.mxu0 %v225
          %395 = vmatprep.subr.mxu0 %v228
          %396 = vmatpush1.xpose.msra.mxu0 %v227
          %397 = vmatprep.subr.mxu0 %v230
          %398 = vmatpush1.xpose.msra.mxu0 %v229
          %399 = vmatprep.subr.mxu0 %v232
          %400 = vmatpush1.xpose.msra.mxu0 %v231
          %401 = vmatprep.subr.mxu0 0.0
          %402 = vmatpush1.xpose.msra.mxu0 0.0
          %403 = vmatprep.subr.mxu0 0.0
          %404 = vmatpush1.xpose.msra.mxu0 0.0
          %405 = vmatprep.subr.mxu0 0.0
          %406 = vmatpush1.xpose.msra.mxu0 0.0
          %407 = vmatprep.subr.mxu0 0.0
          %408 = vmatpush1.xpose.msra.mxu0 0.0
          %409 = vmatprep.subr.mxu0 0.0
          %410 = vmatpush1.xpose.msra.mxu0 0.0
          %411 = vmatprep.subr.mxu0 0.0
          %412 = vmatpush1.xpose.msra.mxu0 0.0
          %413 = vmatprep.subr.mxu0 0.0
          %414 = vmatpush1.xpose.msra.mxu0 0.0
          %415 = vmatprep.subr.mxu0 0.0
          %416 = vmatpush1.xpose.msra.mxu0 0.0
          %417 = vmatprep.subr.mxu0 0.0
          %418 = vmatpush1.xpose.msra.mxu0 0.0
          %419 = vmatprep.subr.mxu0 0.0
          %420 = vmatpush1.xpose.msra.mxu0 0.0
          %421 = vmatprep.subr.mxu0 0.0
          %422 = vmatpush1.xpose.msra.mxu0 0.0
          %423 = vmatprep.subr.mxu0 0.0
          %424 = vmatpush1.xpose.msra.mxu0 0.0
          %425 = vmatprep.subr.mxu0 0.0
          %426 = vmatpush1.xpose.msra.mxu0 0.0
          %427 = vmatprep.subr.mxu0 0.0
          %428 = vmatpush1.xpose.msra.mxu0 0.0
          %429 = vmatprep.subr.mxu0 0.0
          %430 = vmatpush1.xpose.msra.mxu0 0.0
          %431 = vmatprep.subr.mxu0 0.0
          %432 = vmatpush1.xpose.msra.mxu0 0.0
          %433 = vmatprep.subr.mxu0 0.0
          %434 = vmatpush1.xpose.msra.mxu0 0.0
          %435 = vmatprep.subr.mxu0 0.0
          %436 = vmatpush1.xpose.msra.mxu0 0.0
          %437 = vmatprep.subr.mxu0 0.0
          %438 = vmatpush1.xpose.msra.mxu0 0.0
          %439 = vmatprep.subr.mxu0 0.0
          %440 = vmatpush1.xpose.msra.mxu0 0.0
          %441 = vmatprep.subr.mxu0 0.0
          %442 = vmatpush1.xpose.msra.mxu0 0.0
          %443 = vmatprep.subr.mxu0 0.0
          %444 = vmatpush1.xpose.msra.mxu0 0.0
          %445 = vmatprep.subr.mxu0 0.0
          %446 = vmatpush1.xpose.msra.mxu0 0.0
          %447 = vmatprep.subr.mxu0 0.0
          %448 = vmatpush1.xpose.msra.mxu0 0.0
          %449 = vmatprep.subr.mxu0 0.0
          %450 = vmatpush1.xpose.msra.mxu0 0.0
          %451 = vmatprep.subr.mxu0 0.0
          %452 = vmatpush1.xpose.msra.mxu0 0.0
          %453 = vmatprep.subr.mxu0 0.0
          %454 = vmatpush1.xpose.msra.mxu0 0.0
          %455 = vmatprep.subr.mxu0 0.0
          %456 = vmatpush1.xpose.msra.mxu0 0.0
          %457 = vmatprep.mubr.f32.mxu0 %v226
          %458 = vmatmul.mubr.f32.gmra.mrb[0].mxu0 %v225
          %v459 = vpop.f32.mrb[0].mxu0
          %v460 = vadd.f32 0.0, %v459
          %v461 = vpop.f32.mrb[0].mxu0
          %462 = vmatprep.mubr.f32.mxu0 %v228
          %463 = vmatmul.mubr.f32.gmra.mrb[0].mxu0 %v227
          %v464 = vpop.f32.mrb[0].mxu0
          %v465 = vadd.f32 0.0, %v464
          %v466 = vpop.f32.mrb[0].mxu0
          %467 = vmatprep.mubr.f32.mxu0 %v230
          %468 = vmatmul.mubr.f32.gmra.mrb[0].mxu0 %v229
          %v469 = vpop.f32.mrb[0].mxu0
          %v470 = vadd.f32 0.0, %v469
          %v471 = vpop.f32.mrb[0].mxu0
          %472 = vmatprep.mubr.f32.mxu0 %v232
          %473 = vmatmul.mubr.f32.gmra.mrb[0].mxu0 %v231
          %v474 = vpop.f32.mrb[0].mxu0
          %v475 = vadd.f32 0.0, %v474
          %v476 = vpop.f32.mrb[0].mxu0
          %477 = vdwg.mxu0
          %v478 = vsel %vm294, %v460, inf
          %479 = vmin.xlane.f32.xlu0 %v478
          %v480 = vpop.xlane.xlu0 %479
          %v481 = vsel %vm294, %v465, inf
          %482 = vmin.xlane.f32.xlu0 %v481
          %v483 = vpop.xlane.xlu0 %482
          %v484 = vsel %vm294, %v470, inf
          %485 = vmin.xlane.f32.xlu0 %v484
          %v486 = vpop.xlane.xlu0 %485
          %v487 = vsel %vm294, %v475, inf
          %488 = vmin.xlane.f32.xlu0 %v487
          %v489 = vpop.xlane.xlu0 %488
          %v490 = vsub.f32 %v480, %v460
          %v491 = vsub.f32 %v483, %v465
          %v492 = vsub.f32 %v486, %v470
          %v493 = vsub.f32 %v489, %v475
          %v494 = vmul.f32 %v490, 1.442695
          %v495 = vpow.pop %v494
          %v496 = vmul.f32 %v491, 1.442695
          %v497 = vpow.pop %v496
          %v498 = vmul.f32 %v492, 1.442695
          %v499 = vpow.pop %v498
          %v500 = vmul.f32 %v493, 1.442695
          %v501 = vpow.pop %v500
          %v502 = vsel %vm294, %v495, 0.0
          %503 = vadd.xlane.f32.xlu0 %v502
          %v504 = vpop.xlane.xlu0 %503
          %v505 = vsel %vm294, %v497, 0.0
          %506 = vadd.xlane.f32.xlu0 %v505
          %v507 = vpop.xlane.xlu0 %506
          %v508 = vsel %vm294, %v499, 0.0
          %509 = vadd.xlane.f32.xlu0 %v508
          %v510 = vpop.xlane.xlu0 %509
          %v511 = vsel %vm294, %v501, 0.0
          %512 = vadd.xlane.f32.xlu0 %v511
          %v513 = vpop.xlane.xlu0 %512
          %v514 = vrcp.pop %v504
          %v515 = vrcp.pop %v507
          %v516 = vrcp.pop %v510
          %v517 = vrcp.pop %v513
          %v518 = vmul.f32 %v495, %v514
          %v519 = vmul.f32 %v497, %v515
          %v520 = vmul.f32 %v499, %v516
          %v521 = vmul.f32 %v501, %v517
          %522 = vst.msk [vmem:[#allocation5] sm:$0xff] %vm294, %v518
          %523 = vst.msk [vmem:[#allocation5 + $0x8] sm:$0xff] %vm294, %v519
          %524 = vst.msk [vmem:[#allocation5 + $0x10] sm:$0xff] %vm294, %v520
          %525 = vst.msk [vmem:[#allocation5 + $0x18] sm:$0xff] %vm294, %v521
        $region44: #{_lambda_.1} parent=35 // pred_fallthru
          _
        %s526 = smul.u32 %s21, 128
        %s527 = sshra.s32 %s526, 7
        %s528 = sand.u32 %s526, 127
        %s529 = smul.addr %s527, 8
        %s530 = scalar_lea.vmem %s219, %s529
        %v531 = vld [vmem:[%s530] sm:$0xff]
        %v532 = vld [vmem:[%s530 + $0x10] sm:$0xff]
        %v533 = vld [vmem:[%s530 + $0x20] sm:$0xff]
        %v534 = vld [vmem:[%s530 + $0x30] sm:$0xff]
        %s535 = smul.addr %s527, 4
        %s536 = scalar_lea.vmem [#allocation2], %s535
        %v537 = vld [vmem:[%s536] sm:$0xf]
        %v538 = vld [vmem:[#allocation3] sm:$0xff]
        %v540 = vunpack.c.l.b16 %v538
        %v541 = vunpack.c.h.b16 %v538
        %v542 = vpack.c.b16 %v540, %v540
        %v543 = vpack.c.b16 %v541, %v541
        %546 = vxpose.xlu0.c.b16.start [1/8] %v542, 128
        %547 = vxpose.xlu0.c.b16.cont [2/8] 0, 128
        %548 = vxpose.xlu0.c.b16.cont [3/8] 0, 128
        %549 = vxpose.xlu0.c.b16.cont [4/8] 0, 128
        %550 = vxpose.xlu0.c.b16.cont [5/8] 0, 128
        %551 = vxpose.xlu0.c.b16.cont [6/8] 0, 128
        %552 = vxpose.xlu0.c.b16.cont [7/8] 0, 128
        %553 = vxpose.xlu0.c.b16.end [8/8] 0, 128
        %v554 = vpop.trf.xlu0
        %v555 = vpop.trf.xlu0
        %v556 = vpop.trf.xlu0
        %v557 = vpop.trf.xlu0
        %v558 = vpop.trf.xlu0
        %v559 = vpop.trf.xlu0
        %v560 = vpop.trf.xlu0
        %v561 = vpop.trf.xlu0
        %562 = vxpose.xlu0.c.b16.start [1/8] %v543, 128
        %563 = vxpose.xlu0.c.b16.cont [2/8] 0, 128
        %564 = vxpose.xlu0.c.b16.cont [3/8] 0, 128
        %565 = vxpose.xlu0.c.b16.cont [4/8] 0, 128
        %566 = vxpose.xlu0.c.b16.cont [5/8] 0, 128
        %567 = vxpose.xlu0.c.b16.cont [6/8] 0, 128
        %568 = vxpose.xlu0.c.b16.cont [7/8] 0, 128
        %569 = vxpose.xlu0.c.b16.end [8/8] 0, 128
        %v570 = vpop.trf.xlu0
        %v571 = vpop.trf.xlu0
        %v572 = vpop.trf.xlu0
        %v573 = vpop.trf.xlu0
        %v574 = vpop.trf.xlu0
        %v575 = vpop.trf.xlu0
        %v576 = vpop.trf.xlu0
        %v577 = vpop.trf.xlu0
        %vm578 = vcmask 64512
        %v580 = vsel %vm578, %v554, 0
        %v583 = vsel %vm578, %v555, 0
        %v586 = vsel %vm578, %v556, 0
        %v589 = vsel %vm578, %v557, 0
        %v592 = vsel %vm578, %v558, 0
        %v595 = vsel %vm578, %v559, 0
        %v598 = vsel %vm578, %v560, 0
        %v601 = vsel %vm578, %v561, 0
        %v604 = vsel %vm578, %v570, 0
        %v607 = vsel %vm578, %v571, 0
        %v610 = vsel %vm578, %v572, 0
        %v613 = vsel %vm578, %v573, 0
        %v616 = vsel %vm578, %v574, 0
        %v619 = vsel %vm578, %v575, 0
        %v622 = vsel %vm578, %v576, 0
        %v625 = vsel %vm578, %v577, 0
        %vm627 = vcmask 1043456
        %v629 = vsel %vm627, %v537, 0
        %631 = vmatprep.subr.bf16.mxu0 0
        %632 = vmatpush1.bf16.msra.mxu0 %v629
        %633 = vmatprep.subr.bf16.mxu0 0
        %634 = vmatpush1.bf16.msra.mxu0 0
        %635 = vmatprep.subr.bf16.mxu0 0
        %636 = vmatpush1.bf16.msra.mxu0 0
        %637 = vmatprep.subr.bf16.mxu0 0
        %638 = vmatpush1.bf16.msra.mxu0 0
        %639 = vmatprep.subr.bf16.mxu0 0
        %640 = vmatpush1.bf16.msra.mxu0 0
        %641 = vmatprep.subr.bf16.mxu0 0
        %642 = vmatpush1.bf16.msra.mxu0 0
        %643 = vmatprep.subr.bf16.mxu0 0
        %644 = vmatpush1.bf16.msra.mxu0 0
        %645 = vmatprep.subr.bf16.mxu0 0
        %646 = vmatpush1.bf16.msra.mxu0 0
        %647 = vmatprep.subr.bf16.mxu0 0
        %648 = vmatpush1.bf16.msra.mxu0 0
        %649 = vmatprep.subr.bf16.mxu0 0
        %650 = vmatpush1.bf16.msra.mxu0 0
        %651 = vmatprep.subr.bf16.mxu0 0
        %652 = vmatpush1.bf16.msra.mxu0 0
        %653 = vmatprep.subr.bf16.mxu0 0
        %654 = vmatpush1.bf16.msra.mxu0 0
        %655 = vmatprep.subr.bf16.mxu0 0
        %656 = vmatpush1.bf16.msra.mxu0 0
        %657 = vmatprep.subr.bf16.mxu0 0
        %658 = vmatpush1.bf16.msra.mxu0 0
        %659 = vmatprep.subr.bf16.mxu0 0
        %660 = vmatpush1.bf16.msra.mxu0 0
        %661 = vmatprep.subr.bf16.mxu0 0
        %662 = vmatpush1.bf16.msra.mxu0 0
        %663 = vmatprep.mubr.bf16.mxu0 0
        %664 = vmatmul.mubr.bf16.gmra.mrb[0].mxu0 %v580
        %v665 = vpop.f32.mrb[0].mxu0
        %v666 = vadd.f32 0.0, %v665
        %v667 = vpop.f32.mrb[0].mxu0
        %v668 = vpop.f32.mrb[0].mxu0
        %v669 = vadd.f32 0.0, %v668
        %v670 = vpop.f32.mrb[0].mxu0
        %671 = vmatprep.mubr.bf16.mxu0 0
        %672 = vmatmul.mubr.bf16.gmra.mrb[0].mxu0 %v583
        %v673 = vpop.f32.mrb[0].mxu0
        %v674 = vadd.f32 0.0, %v673
        %v675 = vpop.f32.mrb[0].mxu0
        %v676 = vpop.f32.mrb[0].mxu0
        %v677 = vadd.f32 0.0, %v676
        %v678 = vpop.f32.mrb[0].mxu0
        %679 = vmatprep.mubr.bf16.mxu0 0
        %680 = vmatmul.mubr.bf16.gmra.mrb[0].mxu0 %v586
        %v681 = vpop.f32.mrb[0].mxu0
        %v682 = vadd.f32 0.0, %v681
        %v683 = vpop.f32.mrb[0].mxu0
        %v684 = vpop.f32.mrb[0].mxu0
        %v685 = vadd.f32 0.0, %v684
        %v686 = vpop.f32.mrb[0].mxu0
        %687 = vmatprep.mubr.bf16.mxu0 0
        %688 = vmatmul.mubr.bf16.gmra.mrb[0].mxu0 %v589
        %v689 = vpop.f32.mrb[0].mxu0
        %v690 = vadd.f32 0.0, %v689
        %v691 = vpop.f32.mrb[0].mxu0
        %v692 = vpop.f32.mrb[0].mxu0
        %v693 = vadd.f32 0.0, %v692
        %v694 = vpop.f32.mrb[0].mxu0
        %695 = vmatprep.mubr.bf16.mxu0 0
        %696 = vmatmul.mubr.bf16.gmra.mrb[0].mxu0 %v592
        %v697 = vpop.f32.mrb[0].mxu0
        %v698 = vadd.f32 0.0, %v697
        %v699 = vpop.f32.mrb[0].mxu0
        %v700 = vpop.f32.mrb[0].mxu0
        %v701 = vadd.f32 0.0, %v700
        %v702 = vpop.f32.mrb[0].mxu0
        %703 = vmatprep.mubr.bf16.mxu0 0
        %704 = vmatmul.mubr.bf16.gmra.mrb[0].mxu0 %v595
        %v705 = vpop.f32.mrb[0].mxu0
        %v706 = vadd.f32 0.0, %v705
        %v707 = vpop.f32.mrb[0].mxu0
        %v708 = vpop.f32.mrb[0].mxu0
        %v709 = vadd.f32 0.0, %v708
        %v710 = vpop.f32.mrb[0].mxu0
        %711 = vmatprep.mubr.bf16.mxu0 0
        %712 = vmatmul.mubr.bf16.gmra.mrb[0].mxu0 %v598
        %v713 = vpop.f32.mrb[0].mxu0
        %v714 = vadd.f32 0.0, %v713
        %v715 = vpop.f32.mrb[0].mxu0
        %v716 = vpop.f32.mrb[0].mxu0
        %v717 = vadd.f32 0.0, %v716
        %v718 = vpop.f32.mrb[0].mxu0
        %719 = vmatprep.mubr.bf16.mxu0 0
        %720 = vmatmul.mubr.bf16.gmra.mrb[0].mxu0 %v601
        %v721 = vpop.f32.mrb[0].mxu0
        %v722 = vadd.f32 0.0, %v721
        %v723 = vpop.f32.mrb[0].mxu0
        %v724 = vpop.f32.mrb[0].mxu0
        %v725 = vadd.f32 0.0, %v724
        %v726 = vpop.f32.mrb[0].mxu0
        %727 = vmatprep.mubr.bf16.mxu0 0
        %728 = vmatmul.mubr.bf16.gmra.mrb[0].mxu0 %v604
        %v729 = vpop.f32.mrb[0].mxu0
        %v730 = vadd.f32 0.0, %v729
        %v731 = vpop.f32.mrb[0].mxu0
        %v732 = vpop.f32.mrb[0].mxu0
        %v733 = vadd.f32 0.0, %v732
        %v734 = vpop.f32.mrb[0].mxu0
        %735 = vmatprep.mubr.bf16.mxu0 0
        %736 = vmatmul.mubr.bf16.gmra.mrb[0].mxu0 %v607
        %v737 = vpop.f32.mrb[0].mxu0
        %v738 = vadd.f32 0.0, %v737
        %v739 = vpop.f32.mrb[0].mxu0
        %v740 = vpop.f32.mrb[0].mxu0
        %v741 = vadd.f32 0.0, %v740
        %v742 = vpop.f32.mrb[0].mxu0
        %743 = vmatprep.mubr.bf16.mxu0 0
        %744 = vmatmul.mubr.bf16.gmra.mrb[0].mxu0 %v610
        %v745 = vpop.f32.mrb[0].mxu0
        %v746 = vadd.f32 0.0, %v745
        %v747 = vpop.f32.mrb[0].mxu0
        %v748 = vpop.f32.mrb[0].mxu0
        %v749 = vadd.f32 0.0, %v748
        %v750 = vpop.f32.mrb[0].mxu0
        %751 = vmatprep.mubr.bf16.mxu0 0
        %752 = vmatmul.mubr.bf16.gmra.mrb[0].mxu0 %v613
        %v753 = vpop.f32.mrb[0].mxu0
        %v754 = vadd.f32 0.0, %v753
        %v755 = vpop.f32.mrb[0].mxu0
        %v756 = vpop.f32.mrb[0].mxu0
        %v757 = vadd.f32 0.0, %v756
        %v758 = vpop.f32.mrb[0].mxu0
        %759 = vmatprep.mubr.bf16.mxu0 0
        %760 = vmatmul.mubr.bf16.gmra.mrb[0].mxu0 %v616
        %v761 = vpop.f32.mrb[0].mxu0
        %v762 = vadd.f32 0.0, %v761
        %v763 = vpop.f32.mrb[0].mxu0
        %v764 = vpop.f32.mrb[0].mxu0
        %v765 = vadd.f32 0.0, %v764
        %v766 = vpop.f32.mrb[0].mxu0
        %767 = vmatprep.mubr.bf16.mxu0 0
        %768 = vmatmul.mubr.bf16.gmra.mrb[0].mxu0 %v619
        %v769 = vpop.f32.mrb[0].mxu0
        %v770 = vadd.f32 0.0, %v769
        %v771 = vpop.f32.mrb[0].mxu0
        %v772 = vpop.f32.mrb[0].mxu0
        %v773 = vadd.f32 0.0, %v772
        %v774 = vpop.f32.mrb[0].mxu0
        %775 = vmatprep.mubr.bf16.mxu0 0
        %776 = vmatmul.mubr.bf16.gmra.mrb[0].mxu0 %v622
        %v777 = vpop.f32.mrb[0].mxu0
        %v778 = vadd.f32 0.0, %v777
        %v779 = vpop.f32.mrb[0].mxu0
        %v780 = vpop.f32.mrb[0].mxu0
        %v781 = vadd.f32 0.0, %v780
        %v782 = vpop.f32.mrb[0].mxu0
        %783 = vmatprep.mubr.bf16.mxu0 0
        %784 = vmatmul.mubr.bf16.gmra.mrb[0].mxu0 %v625
        %v785 = vpop.f32.mrb[0].mxu0
        %v786 = vadd.f32 0.0, %v785
        %v787 = vpop.f32.mrb[0].mxu0
        %v788 = vpop.f32.mrb[0].mxu0
        %v789 = vadd.f32 0.0, %v788
        %v790 = vpop.f32.mrb[0].mxu0
        %791 = vdwg.mxu0
        %v792 = vmax.f32 %v666, %v682
        %v793 = vmax.f32 %v669, %v685
        %v794 = vmax.f32 %v674, %v690
        %v795 = vmax.f32 %v677, %v693
        %v796 = vmax.f32 %v792, %v698
        %v797 = vmax.f32 %v793, %v701
        %v798 = vmax.f32 %v794, %v706
        %v799 = vmax.f32 %v795, %v709
        %v800 = vmax.f32 %v796, %v714
        %v801 = vmax.f32 %v797, %v717
        %v802 = vmax.f32 %v798, %v722
        %v803 = vmax.f32 %v799, %v725
        %v804 = vmax.f32 %v800, %v730
        %v805 = vmax.f32 %v801, %v733
        %v806 = vmax.f32 %v802, %v738
        %v807 = vmax.f32 %v803, %v741
        %v808 = vmax.f32 %v804, %v746
        %v809 = vmax.f32 %v805, %v749
        %v810 = vmax.f32 %v806, %v754
        %v811 = vmax.f32 %v807, %v757
        %v812 = vmax.f32 %v808, %v762
        %v813 = vmax.f32 %v809, %v765
        %v814 = vmax.f32 %v810, %v770
        %v815 = vmax.f32 %v811, %v773
        %v816 = vmax.f32 %v812, %v778
        %v817 = vmax.f32 %v813, %v781
        %v818 = vmax.f32 %v814, %v786
        %v819 = vmax.f32 %v815, %v789
        %v820 = vmax.f32 %v816, %v817
        %v821 = vmax.f32 %v818, %v819
        %v822 = vmax.f32 %v820, %v821
        %v823 = vrot.slane %v822, 4
        %v824 = vmax.f32 %v822, %v823
        %v825 = vrot.slane %v824, 2
        %v826 = vmax.f32 %v824, %v825
        %v827 = vrot.slane %v826, 1
        %v828 = vmax.f32 %v826, %v827
        %v829 = vsub.f32 %v666, %v828
        %v830 = vsub.f32 %v669, %v828
        %v831 = vsub.f32 %v674, %v828
        %v832 = vsub.f32 %v677, %v828
        %v833 = vsub.f32 %v682, %v828
        %v834 = vsub.f32 %v685, %v828
        %v835 = vsub.f32 %v690, %v828
        %v836 = vsub.f32 %v693, %v828
        %v837 = vsub.f32 %v698, %v828
        %v838 = vsub.f32 %v701, %v828
        %v839 = vsub.f32 %v706, %v828
        %v840 = vsub.f32 %v709, %v828
        %v841 = vsub.f32 %v714, %v828
        %v842 = vsub.f32 %v717, %v828
        %v843 = vsub.f32 %v722, %v828
        %v844 = vsub.f32 %v725, %v828
        %v845 = vsub.f32 %v730, %v828
        %v846 = vsub.f32 %v733, %v828
        %v847 = vsub.f32 %v738, %v828
        %v848 = vsub.f32 %v741, %v828
        %v849 = vsub.f32 %v746, %v828
        %v850 = vsub.f32 %v749, %v828
        %v851 = vsub.f32 %v754, %v828
        %v852 = vsub.f32 %v757, %v828
        %v853 = vsub.f32 %v762, %v828
        %v854 = vsub.f32 %v765, %v828
        %v855 = vsub.f32 %v770, %v828
        %v856 = vsub.f32 %v773, %v828
        %v857 = vsub.f32 %v778, %v828
        %v858 = vsub.f32 %v781, %v828
        %v859 = vsub.f32 %v786, %v828
        %v860 = vsub.f32 %v789, %v828
        %v861 = vmul.f32 %v829, 1.442695
        %v862 = vpow.pop %v861
        %v863 = vmul.f32 %v830, 1.442695
        %v864 = vpow.pop %v863
        %v865 = vmul.f32 %v831, 1.442695
        %v866 = vpow.pop %v865
        %v867 = vmul.f32 %v832, 1.442695
        %v868 = vpow.pop %v867
        %v869 = vmul.f32 %v833, 1.442695
        %v870 = vpow.pop %v869
        %v871 = vmul.f32 %v834, 1.442695
        %v872 = vpow.pop %v871
        %v873 = vmul.f32 %v835, 1.442695
        %v874 = vpow.pop %v873
        %v875 = vmul.f32 %v836, 1.442695
        %v876 = vpow.pop %v875
        %v877 = vmul.f32 %v837, 1.442695
        %v878 = vpow.pop %v877
        %v879 = vmul.f32 %v838, 1.442695
        %v880 = vpow.pop %v879
        %v881 = vmul.f32 %v839, 1.442695
        %v882 = vpow.pop %v881
        %v883 = vmul.f32 %v840, 1.442695
        %v884 = vpow.pop %v883
        %v885 = vmul.f32 %v841, 1.442695
        %v886 = vpow.pop %v885
        %v887 = vmul.f32 %v842, 1.442695
        %v888 = vpow.pop %v887
        %v889 = vmul.f32 %v843, 1.442695
        %v890 = vpow.pop %v889
        %v891 = vmul.f32 %v844, 1.442695
        %v892 = vpow.pop %v891
        %v893 = vmul.f32 %v845, 1.442695
        %v894 = vpow.pop %v893
        %v895 = vmul.f32 %v846, 1.442695
        %v896 = vpow.pop %v895
        %v897 = vmul.f32 %v847, 1.442695
        %v898 = vpow.pop %v897
        %v899 = vmul.f32 %v848, 1.442695
        %v900 = vpow.pop %v899
        %v901 = vmul.f32 %v849, 1.442695
        %v902 = vpow.pop %v901
        %v903 = vmul.f32 %v850, 1.442695
        %v904 = vpow.pop %v903
        %v905 = vmul.f32 %v851, 1.442695
        %v906 = vpow.pop %v905
        %v907 = vmul.f32 %v852, 1.442695
        %v908 = vpow.pop %v907
        %v909 = vmul.f32 %v853, 1.442695
        %v910 = vpow.pop %v909
        %v911 = vmul.f32 %v854, 1.442695
        %v912 = vpow.pop %v911
        %v913 = vmul.f32 %v855, 1.442695
        %v914 = vpow.pop %v913
        %v915 = vmul.f32 %v856, 1.442695
        %v916 = vpow.pop %v915
        %v917 = vmul.f32 %v857, 1.442695
        %v918 = vpow.pop %v917
        %v919 = vmul.f32 %v858, 1.442695
        %v920 = vpow.pop %v919
        %v921 = vmul.f32 %v859, 1.442695
        %v922 = vpow.pop %v921
        %v923 = vmul.f32 %v860, 1.442695
        %v924 = vpow.pop %v923
        %v925 = vadd.f32 %v862, %v864
        %v926 = vadd.f32 %v925, %v866
        %v927 = vadd.f32 %v926, %v868
        %v928 = vadd.f32 %v927, %v870
        %v929 = vadd.f32 %v928, %v872
        %v930 = vadd.f32 %v929, %v874
        %v931 = vadd.f32 %v930, %v876
        %v932 = vadd.f32 %v931, %v878
        %v933 = vadd.f32 %v932, %v880
        %v934 = vadd.f32 %v933, %v882
        %v935 = vadd.f32 %v934, %v884
        %v936 = vadd.f32 %v935, %v886
        %v937 = vadd.f32 %v936, %v888
        %v938 = vadd.f32 %v937, %v890
        %v939 = vadd.f32 %v938, %v892
        %v940 = vadd.f32 %v939, %v894
        %v941 = vadd.f32 %v940, %v896
        %v942 = vadd.f32 %v941, %v898
        %v943 = vadd.f32 %v942, %v900
        %v944 = vadd.f32 %v943, %v902
        %v945 = vadd.f32 %v944, %v904
        %v946 = vadd.f32 %v945, %v906
        %v947 = vadd.f32 %v946, %v908
        %v948 = vadd.f32 %v947, %v910
        %v949 = vadd.f32 %v948, %v912
        %v950 = vadd.f32 %v949, %v914
        %v951 = vadd.f32 %v950, %v916
        %v952 = vadd.f32 %v951, %v918
        %v953 = vadd.f32 %v952, %v920
        %v954 = vadd.f32 %v953, %v922
        %v955 = vadd.f32 %v954, %v924
        %v956 = vrot.slane %v955, 4
        %v957 = vadd.f32 %v955, %v956
        %v958 = vrot.slane %v957, 2
        %v959 = vadd.f32 %v957, %v958
        %v960 = vrot.slane %v959, 1
        %v961 = vadd.f32 %v959, %v960
        %v962 = vld [vmem:[#allocation4] sm:$0xff]
        %v963 = vld [vmem:[#allocation4 + $0x8] sm:$0xff]
        %v964 = vld [vmem:[#allocation4 + $0x10] sm:$0xff]
        %v965 = vld [vmem:[#allocation4 + $0x18] sm:$0xff]
        %v966 = vpack.c.bf16 %v864, %v862
        %v967 = vpack.c.bf16 %v868, %v866
        %v968 = vpack.c.bf16 %v872, %v870
        %v969 = vpack.c.bf16 %v876, %v874
        %v970 = vpack.c.bf16 %v880, %v878
        %v971 = vpack.c.bf16 %v884, %v882
        %v972 = vpack.c.bf16 %v888, %v886
        %v973 = vpack.c.bf16 %v892, %v890
        %v974 = vpack.c.bf16 %v896, %v894
        %v975 = vpack.c.bf16 %v900, %v898
        %v976 = vpack.c.bf16 %v904, %v902
        %v977 = vpack.c.bf16 %v908, %v906
        %v978 = vpack.c.bf16 %v912, %v910
        %v979 = vpack.c.bf16 %v916, %v914
        %v980 = vpack.c.bf16 %v920, %v918
        %v981 = vpack.c.bf16 %v924, %v922
        %982 = vmatprep.subr.bf16.mxu0 0
        %983 = vmatpush1.bf16.msra.mxu0 %v966
        %984 = vmatprep.subr.bf16.mxu0 0
        %985 = vmatpush1.bf16.msra.mxu0 %v967
        %986 = vmatprep.subr.bf16.mxu0 0
        %987 = vmatpush1.bf16.msra.mxu0 %v968
        %988 = vmatprep.subr.bf16.mxu0 0
        %989 = vmatpush1.bf16.msra.mxu0 %v969
        %990 = vmatprep.subr.bf16.mxu0 0
        %991 = vmatpush1.bf16.msra.mxu0 %v970
        %992 = vmatprep.subr.bf16.mxu0 0
        %993 = vmatpush1.bf16.msra.mxu0 %v971
        %994 = vmatprep.subr.bf16.mxu0 0
        %995 = vmatpush1.bf16.msra.mxu0 %v972
        %996 = vmatprep.subr.bf16.mxu0 0
        %997 = vmatpush1.bf16.msra.mxu0 %v973
        %998 = vmatprep.subr.bf16.mxu0 0
        %999 = vmatpush1.bf16.msra.mxu0 %v974
        %1000 = vmatprep.subr.bf16.mxu0 0
        %1001 = vmatpush1.bf16.msra.mxu0 %v975
        %1002 = vmatprep.subr.bf16.mxu0 0
        %1003 = vmatpush1.bf16.msra.mxu0 %v976
        %1004 = vmatprep.subr.bf16.mxu0 0
        %1005 = vmatpush1.bf16.msra.mxu0 %v977
        %1006 = vmatprep.subr.bf16.mxu0 0
        %1007 = vmatpush1.bf16.msra.mxu0 %v978
        %1008 = vmatprep.subr.bf16.mxu0 0
        %1009 = vmatpush1.bf16.msra.mxu0 %v979
        %1010 = vmatprep.subr.bf16.mxu0 0
        %1011 = vmatpush1.bf16.msra.mxu0 %v980
        %1012 = vmatprep.subr.bf16.mxu0 0
        %1013 = vmatpush1.bf16.msra.mxu0 %v981
        %1014 = vmatprep.mubr.bf16.mxu0 %v963
        %1015 = vmatmul.mubr.bf16.gmra.mrb[0].mxu0 %v962
        %v1016 = vpop.f32.mrb[0].mxu0
        %v1017 = vadd.f32 0.0, %v1016
        %v1018 = vpop.f32.mrb[0].mxu0
        %v1019 = vpop.f32.mrb[0].mxu0
        %v1020 = vadd.f32 0.0, %v1019
        %v1021 = vpop.f32.mrb[0].mxu0
        %1022 = vmatprep.mubr.bf16.mxu0 %v965
        %1023 = vmatmul.mubr.bf16.gmra.mrb[0].mxu0 %v964
        %v1024 = vpop.f32.mrb[0].mxu0
        %v1025 = vadd.f32 0.0, %v1024
        %v1026 = vpop.f32.mrb[0].mxu0
        %v1027 = vpop.f32.mrb[0].mxu0
        %v1028 = vadd.f32 0.0, %v1027
        %v1029 = vpop.f32.mrb[0].mxu0
        %1030 = vdwg.mxu0
        %v1031 = vrcp.pop %v961
        %v1032 = vmul.f32 %v1017, %v1031
        %v1033 = vmul.f32 %v1020, %v1031
        %v1034 = vmul.f32 %v1025, %v1031
        %v1035 = vmul.f32 %v1028, %v1031
        %v1036 = vld [vmem:[#allocation5] sm:$0xff]
        %v1037 = vld [vmem:[#allocation5 + $0x8] sm:$0xff]
        %v1038 = vld [vmem:[#allocation5 + $0x10] sm:$0xff]
        %v1039 = vld [vmem:[#allocation5 + $0x18] sm:$0xff]
        %vm1040 = vcmask 261120
        %v1042 = vsel %vm1040, %v1036, 0
        %v1045 = vsel %vm1040, %v1037, 0
        %v1048 = vsel %vm1040, %v1038, 0
        %v1051 = vsel %vm1040, %v1039, 0
        %1053 = vmatprep.subr.mxu0 0.0
        %1054 = vmatpush1.msra.mxu0 %v531
        %1055 = vmatprep.subr.mxu0 0.0
        %1056 = vmatpush1.msra.mxu0 %v532
        %1057 = vmatprep.subr.mxu0 0.0
        %1058 = vmatpush1.msra.mxu0 %v533
        %1059 = vmatprep.subr.mxu0 0.0
        %1060 = vmatpush1.msra.mxu0 %v534
        %1061 = vmatprep.subr.mxu0 0.0
        %1062 = vmatpush1.msra.mxu0 0.0
        %1063 = vmatprep.subr.mxu0 0.0
        %1064 = vmatpush1.msra.mxu0 0.0
        %1065 = vmatprep.subr.mxu0 0.0
        %1066 = vmatpush1.msra.mxu0 0.0
        %1067 = vmatprep.subr.mxu0 0.0
        %1068 = vmatpush1.msra.mxu0 0.0
        %1069 = vmatprep.subr.mxu0 0.0
        %1070 = vmatpush1.msra.mxu0 0.0
        %1071 = vmatprep.subr.mxu0 0.0
        %1072 = vmatpush1.msra.mxu0 0.0
        %1073 = vmatprep.subr.mxu0 0.0
        %1074 = vmatpush1.msra.mxu0 0.0
        %1075 = vmatprep.subr.mxu0 0.0
        %1076 = vmatpush1.msra.mxu0 0.0
        %1077 = vmatprep.subr.mxu0 0.0
        %1078 = vmatpush1.msra.mxu0 0.0
        %1079 = vmatprep.subr.mxu0 0.0
        %1080 = vmatpush1.msra.mxu0 0.0
        %1081 = vmatprep.subr.mxu0 0.0
        %1082 = vmatpush1.msra.mxu0 0.0
        %1083 = vmatprep.subr.mxu0 0.0
        %1084 = vmatpush1.msra.mxu0 0.0
        %1085 = vmatprep.subr.mxu0 0.0
        %1086 = vmatpush1.msra.mxu0 0.0
        %1087 = vmatprep.subr.mxu0 0.0
        %1088 = vmatpush1.msra.mxu0 0.0
        %1089 = vmatprep.subr.mxu0 0.0
        %1090 = vmatpush1.msra.mxu0 0.0
        %1091 = vmatprep.subr.mxu0 0.0
        %1092 = vmatpush1.msra.mxu0 0.0
        %1093 = vmatprep.subr.mxu0 0.0
        %1094 = vmatpush1.msra.mxu0 0.0
        %1095 = vmatprep.subr.mxu0 0.0
        %1096 = vmatpush1.msra.mxu0 0.0
        %1097 = vmatprep.subr.mxu0 0.0
        %1098 = vmatpush1.msra.mxu0 0.0
        %1099 = vmatprep.subr.mxu0 0.0
        %1100 = vmatpush1.msra.mxu0 0.0
        %1101 = vmatprep.subr.mxu0 0.0
        %1102 = vmatpush1.msra.mxu0 0.0
        %1103 = vmatprep.subr.mxu0 0.0
        %1104 = vmatpush1.msra.mxu0 0.0
        %1105 = vmatprep.subr.mxu0 0.0
        %1106 = vmatpush1.msra.mxu0 0.0
        %1107 = vmatprep.subr.mxu0 0.0
        %1108 = vmatpush1.msra.mxu0 0.0
        %1109 = vmatprep.subr.mxu0 0.0
        %1110 = vmatpush1.msra.mxu0 0.0
        %1111 = vmatprep.subr.mxu0 0.0
        %1112 = vmatpush1.msra.mxu0 0.0
        %1113 = vmatprep.subr.mxu0 0.0
        %1114 = vmatpush1.msra.mxu0 0.0
        %1115 = vmatprep.subr.mxu0 0.0
        %1116 = vmatpush1.msra.mxu0 0.0
        %1117 = vmatprep.mubr.f32.mxu0 0.0
        %1118 = vmatmul.mubr.f32.gmra.mrb[0].mxu0 %v1042
        %v1119 = vpop.f32.mrb[0].mxu0
        %v1120 = vadd.f32 0.0, %v1119
        %v1121 = vpop.f32.mrb[0].mxu0
        %1122 = vmatprep.mubr.f32.mxu0 0.0
        %1123 = vmatmul.mubr.f32.gmra.mrb[0].mxu0 %v1045
        %v1124 = vpop.f32.mrb[0].mxu0
        %v1125 = vadd.f32 0.0, %v1124
        %v1126 = vpop.f32.mrb[0].mxu0
        %1127 = vmatprep.mubr.f32.mxu0 0.0
        %1128 = vmatmul.mubr.f32.gmra.mrb[0].mxu0 %v1048
        %v1129 = vpop.f32.mrb[0].mxu0
        %v1130 = vadd.f32 0.0, %v1129
        %v1131 = vpop.f32.mrb[0].mxu0
        %1132 = vmatprep.mubr.f32.mxu0 0.0
        %1133 = vmatmul.mubr.f32.gmra.mrb[0].mxu0 %v1051
        %v1134 = vpop.f32.mrb[0].mxu0
        %v1135 = vadd.f32 0.0, %v1134
        %v1136 = vpop.f32.mrb[0].mxu0
        %1137 = vdwg.mxu0
        %s1138 = sld [smem:[#allocation6]]
        %s1139 = sld [smem:[#allocation6 + $0x1]]
        %v1140 = vstv %s1138
        %v1141 = vmul.f32 %v1140, %v1032
        %v1142 = vmul.f32 %v1140, %v1033
        %v1143 = vmul.f32 %v1140, %v1034
        %v1144 = vmul.f32 %v1140, %v1035
        %v1145 = vstv %s1139
        %v1146 = vmul.f32 %v1145, %v1120
        %v1147 = vmul.f32 %v1145, %v1125
        %v1148 = vmul.f32 %v1145, %v1130
        %v1149 = vmul.f32 %v1145, %v1135
        %v1150 = vadd.f32 %v1141, %v1146
        %v1151 = vadd.f32 %v1142, %v1147
        %v1152 = vadd.f32 %v1143, %v1148
        %v1153 = vadd.f32 %v1144, %v1149
        %v1154 = vmul.f32 %v531, 2.0
        %v1155 = vmul.f32 %v532, 2.0
        %v1156 = vmul.f32 %v533, 2.0
        %v1157 = vmul.f32 %v534, 2.0
        %v1158 = vadd.f32 %v1150, %v1154
        %v1159 = vadd.f32 %v1151, %v1155
        %v1160 = vadd.f32 %v1152, %v1156
        %v1161 = vadd.f32 %v1153, %v1157
        %1162 = vst [vmem:[%s214] sm:$0xff] %v1158
        %1163 = vst [vmem:[%s214 + $0x8] sm:$0xff] %v1159
        %1164 = vst [vmem:[%s214 + $0x10] sm:$0xff] %v1160
        %1165 = vst [vmem:[%s214 + $0x18] sm:$0xff] %v1161
        %s1166 = sand.u32 %s127, 1
        %s1167 = sand.u32 %s127, 1
        %s1168 = smul.addr %s1167, 32
        %s1169 = scalar_lea.vmem [#allocation8], %s1168
        // Predicated region
        $region45: #{_lambda_.1} parent=35 // pred_check
          %p1170 = pneg %p137
        $region46: #{_lambda_.1} parent=35 // pred_check_branch
          %1172 = sbr.rel (%p1170) target = $region48
        $region47: #{_lambda_.1} parent=35 // pred_region
          %s1173 = smul.addr %s20, 8
          %s1174 = sadd.s32 %s21, %s1173
          %s1175 = smul.addr %s1174, 8
          %s1176 = scalar_lea.vmem %s4, %s1175
          // Predicated region
          $region49: #{_lambda_.1} parent=47 // pred_check
            _
          $region50: #{_lambda_.1} parent=47 // pred_check_branch
            %1178 = sbr.rel (0) target = $region52
          $region51: #{_lambda_.1} parent=47 // pred_region
            // Predicated region
            $region53: #{_lambda_.1} parent=51 // pred_check
              _
            $region54: #{_lambda_.1} parent=51 // pred_check_branch
              %1180 = sbr.rel (0) target = $region56
            $region55: #{_lambda_.1} parent=51 // pred_region
              // Predicated region
              $region68: #{_lambda_.1} parent=55 // pred_check
                _
              $region69: #{_lambda_.1} parent=55 // pred_check_branch
                %1201 = sbr.rel (0) target = $region71
              $region70: #{_lambda_.1} parent=55 // pred_region
                loop: start=0, step=1, limit=1
                $region72: #{_lambda_.1} parent=70 // loop_pre_header
                  _
                $region73: #{_lambda_.1} parent=70 // loop_header
                  %s1203 = sphi 0, %s1207
                  %p1204 = scmp.ge.s32.totalorder %s1203, 1
                  %s1208 = sphi %s1169, %s1169
                  %s1209 = sphi %s1176, %s1176
                $region74: #{_lambda_.1} parent=70 // loop_header_branch
                  %1206 = sbr.rel (%p1204) target = $region78
                $region75: #{_lambda_.1} parent=70 // loop_body
                  %v1210 = vld [vmem:[%s1208] sm:$0xff]
                  %1211 = vst [vmem:[%s1209] sm:$0xff] %v1210
                  %v1212 = vld [vmem:[%s1208 + $0x8] sm:$0xff]
                  %1213 = vst [vmem:[%s1209 + $0x10] sm:$0xff] %v1212
                  %v1214 = vld [vmem:[%s1208 + $0x10] sm:$0xff]
                  %1215 = vst [vmem:[%s1209 + $0x20] sm:$0xff] %v1214
                  %v1216 = vld [vmem:[%s1208 + $0x18] sm:$0xff]
                  %1217 = vst [vmem:[%s1209 + $0x30] sm:$0xff] %v1216
                $region76: #{_lambda_.1} parent=70 // loop_footer
                  %s1207 = sadd.s32 1, %s1203
                $region77: #{_lambda_.1} parent=70 // loop_footer_branch
                  %1202 = sbr.rel target = $region73
                $region78: #{_lambda_.1} parent=70 // loop_exit
                  _
              $region71: #{_lambda_.1} parent=55 // pred_fallthru
                _
              // Predicated region
              $region79: #{_lambda_.1} parent=55 // pred_check
                _
              $region80: #{_lambda_.1} parent=55 // pred_check_branch
                %1219 = sbr.rel target = $region82
              $region81: #{_lambda_.1} parent=55 // pred_region
                _
              $region82: #{_lambda_.1} parent=55 // pred_fallthru
                _
            $region56: #{_lambda_.1} parent=51 // pred_fallthru
              _
            // Predicated region
            $region57: #{_lambda_.1} parent=51 // pred_check
              _
            $region58: #{_lambda_.1} parent=51 // pred_check_branch
              %1182 = sbr.rel target = $region60
            $region59: #{_lambda_.1} parent=51 // pred_region
              loop: start=0, step=1, limit=1
              $region61: #{_lambda_.1} parent=59 // loop_pre_header
                _
              $region62: #{_lambda_.1} parent=59 // loop_header
                %s1185 = sphi 0, %s1189
                %p1186 = scmp.ge.s32.totalorder %s1185, 1
                %s1190 = sphi %s1169, %s1169
                %s1191 = sphi %s1176, %s1176
              $region63: #{_lambda_.1} parent=59 // loop_header_branch
                %1188 = sbr.rel (%p1186) target = $region67
              $region64: #{_lambda_.1} parent=59 // loop_body
                %v1192 = vld [vmem:[%s1190] sm:$0xff]
                %1193 = vst [vmem:[%s1191] sm:$0xff] %v1192
                %v1194 = vld [vmem:[%s1190 + $0x8] sm:$0xff]
                %1195 = vst [vmem:[%s1191 + $0x10] sm:$0xff] %v1194
                %v1196 = vld [vmem:[%s1190 + $0x10] sm:$0xff]
                %1197 = vst [vmem:[%s1191 + $0x20] sm:$0xff] %v1196
                %v1198 = vld [vmem:[%s1190 + $0x18] sm:$0xff]
                %1199 = vst [vmem:[%s1191 + $0x30] sm:$0xff] %v1198
              $region65: #{_lambda_.1} parent=59 // loop_footer
                %s1189 = sadd.s32 1, %s1185
              $region66: #{_lambda_.1} parent=59 // loop_footer_branch
                %1184 = sbr.rel target = $region62
              $region67: #{_lambda_.1} parent=59 // loop_exit
                _
            $region60: #{_lambda_.1} parent=51 // pred_fallthru
              _
          $region52: #{_lambda_.1} parent=47 // pred_fallthru
            _
          %1220 = vnop
        $region48: #{_lambda_.1} parent=35 // pred_fallthru
          _
      $region36: #{_lambda_.1} parent=5 // pred_fallthru
        _
      %p1221 = scmp.le.s32.totalorder 2, %s11
      // Predicated region
      $region83: #{_lambda_.1} parent=5 // pred_check
        %p1222 = pneg %p1221
      $region84: #{_lambda_.1} parent=5 // pred_check_branch
        %1224 = sbr.rel (%p1222) target = $region86
      $region85: #{_lambda_.1} parent=5 // pred_region
        %s1225 = ssub.s32 %s11, 2
        // Predicated region
        $region87: #{_lambda_.1} parent=85 // pred_check
          %p1226 = pneg %p143
        $region88: #{_lambda_.1} parent=85 // pred_check_branch
          %1228 = sbr.rel (%p1226) target = $region90
        $region89: #{_lambda_.1} parent=85 // pred_region
          %s1229 = sand.u32 %s128, 1
          %s1230 = sand.u32 %s128, 1
          %s1231 = smul.addr %s1230, 32
          %s1232 = scalar_lea.vmem [#allocation8], %s1231
        $region90: #{_lambda_.1} parent=85 // pred_fallthru
          _
      $region86: #{_lambda_.1} parent=5 // pred_fallthru
        _
    $region6: #{_lambda_.1} parent=1 // loop_footer
      %s15 = sadd.s32 1, %s11
    $region7: #{_lambda_.1} parent=1 // loop_footer_branch
      %10 = sbr.rel target = $region3
    $region8: #{_lambda_.1} parent=1 // loop_exit
      _
    %1233 = vsyncpa [#allocation7], 1
    %s1234 = scalar_lea.sflag [#allocation7], 1
    %1235 = vsyncpa %s1234, 1

</llo_original>
